<compile_context>
chip_gen: v5e
topology: v5e:2x2
jax: 0.10.0
libtpu: 0.0.40
codegen_flags: <defaults>
</compile_context>

<pallas_src>
import math

import jax
import jax.numpy as jnp
from jax.experimental import pallas as pl
from jax.experimental.pallas import tpu as pltpu


def _make_gcn_kernel(has_bias):
    def kernel(x_ref, att_ref, w_ref, *rest):
        if has_bias:
            bias_ref, o_ref, sup_ref = rest
        else:
            o_ref, sup_ref = rest
            bias_ref = None

        bblk, node_n, in_f = x_ref.shape
        out_f = o_ref.shape[-1]
        f32 = jnp.float32

        # f32 inputs -> full-precision MXU passes; bf16 inputs -> single pass.
        prec_xw = (jax.lax.Precision.HIGHEST if x_ref.dtype == f32
                   else jax.lax.Precision.DEFAULT)

        # (1) Tall lane-dense matmul: support = x @ W,
        #     M = bblk * node_n, K = in_features, N = out_features, f32 accum.
        x2 = x_ref[...].reshape(bblk * node_n, in_f)
        sup = jnp.dot(x2, w_ref[...], precision=prec_xw,
                      preferred_element_type=f32)
        sup_ref[...] = sup.reshape(bblk, node_n, out_f)

        # (2) Per-batch att @ support[b]; att stays resident (a few vregs),
        #     no (bblk, node_n, node_n) broadcast is ever materialized.
        att = att_ref[...].astype(f32)
        bias = bias_ref[...] if has_bias else None

        @pl.loop(0, bblk)
        def _per_batch(b):
            yb = jnp.dot(att, sup_ref[b],
                         precision=jax.lax.Precision.HIGHEST,
                         preferred_element_type=f32)
            if has_bias:
                yb = yb + bias
            o_ref[b] = yb.astype(o_ref.dtype)

    return kernel


def graph_convolution(x, weight, att, bias=None, *, batch_block=64,
                      compute_dtype=None, out_dtype=None):
    """GCN layer forward: att @ (x @ weight) + bias.

    x:      (B, node_n, in_features)
    weight: (in_features, out_features)
    att:    (node_n, node_n)
    bias:   (out_features,) or None
    compute_dtype: e.g. jnp.bfloat16 to feed bf16 x/W to the MXU on v6e/v7x
                   (att matmul and accumulation stay f32).
    out_dtype: output dtype (default: x.dtype); pass bf16 to halve the
               dominant HBM write stream if the consumer tolerates it.
    """
    B, node_n, in_features = x.shape
    assert weight.shape[0] == in_features
    out_features = weight.shape[1]
    out_dtype = x.dtype if out_dtype is None else out_dtype
    has_bias = bias is not None

    # Big HBM streams optionally in bf16; att kept f32 (tiny, exact 2nd matmul).
    if compute_dtype is not None:
        x_c = x.astype(compute_dtype)
        w_c = weight.astype(compute_dtype)
    else:
        x_c, w_c = x, weight
    att_c = att.astype(jnp.float32)

    # Batch block: as large as batch_block allows, but capped at ceil(B/2) so
    # there are >= 2 parallel grid steps whenever B >= 2 (v7x: 2 TensorCores).
    bblk = max(1, min(batch_block, pl.cdiv(B, 2)))
    grid = (pl.cdiv(B, bblk),)   # cdiv grid: partial last block is masked

    # ---- advisory cost estimate (true widths, actual dtypes) ---------------
    flops = (2 * B * node_n * in_features * out_features
             + 2 * B * node_n * node_n * out_features)
    out_itemsize = jnp.dtype(out_dtype).itemsize
    bytes_accessed = int(
        x_c.size * x_c.dtype.itemsize
        + att_c.size * att_c.dtype.itemsize
        + w_c.size * w_c.dtype.itemsize
        + (out_features * 4 if has_bias else 0)
        + B * node_n * out_features * out_itemsize)

    # ---- explicit scoped-VMEM limit (v5e default is only 16 MiB) -----------
    x_blk_b = bblk * node_n * in_features * x_c.dtype.itemsize
    o_blk_b = bblk * node_n * out_features * out_itemsize
    sup_blk_b = bblk * node_n * out_features * 4
    fixed_b = (att_c.size * 4 + w_c.size * w_c.dtype.itemsize
               + (out_features * 4 if has_bias else 0))
    vmem_need = 2 * (x_blk_b + o_blk_b) + sup_blk_b + 2 * fixed_b + (1 << 20)
    vmem_limit = int(min(max(vmem_need, 32 * 1024 * 1024), 64 * 1024 * 1024))

    in_specs = [
        pl.BlockSpec((bblk, node_n, in_features), lambda b: (b, 0, 0)),
        pl.BlockSpec((node_n, node_n), lambda b: (0, 0)),
        pl.BlockSpec((in_features, out_features), lambda b: (0, 0)),
    ]
    args = [x_c, att_c, w_c]
    if has_bias:
        in_specs.append(pl.BlockSpec((1, out_features), lambda b: (0, 0)))
        args.append(bias.astype(jnp.float32).reshape(1, out_features))

    out = pl.pallas_call(
        _make_gcn_kernel(has_bias),
        out_shape=jax.ShapeDtypeStruct((B, node_n, out_features), out_dtype),
        grid_spec=pltpu.PrefetchScalarGridSpec(
            num_scalar_prefetch=0,
            grid=grid,
            in_specs=in_specs,
            # True-width output block (last two dims == full array dims): no
            # 128-padding write, no external slice copy.
            out_specs=pl.BlockSpec((bblk, node_n, out_features),
                                   lambda b: (b, 0, 0)),
            scratch_shapes=[
                pltpu.VMEM((bblk, node_n, out_features), jnp.float32)],
        ),
        compiler_params=pltpu.CompilerParams(
            dimension_semantics=("parallel",),
            vmem_limit_bytes=vmem_limit,
        ),
        cost_estimate=pl.CostEstimate(
            flops=flops, transcendentals=0, bytes_accessed=bytes_accessed),
    )(*args)
    return out


if __name__ == "__main__":
    # Small shapes consistent with the module defaults (node_n=48).
    B = 2
    node_n = 48
    in_features = 32
    out_features = 64

    key = jax.random.PRNGKey(0)
    kx, kw, ka, kb, kx2 = jax.random.split(key, 5)

    # Deterministic init mirroring reset_parameters():
    # uniform(-stdv, stdv) with stdv = 1/sqrt(out_features).
    stdv = 1.0 / math.sqrt(out_features)
    weight = jax.random.uniform(
        kw, (in_features, out_features), jnp.float32, minval=-stdv, maxval=stdv)
    att = jax.random.uniform(
        ka, (node_n, node_n), jnp.float32, minval=-stdv, maxval=stdv)
    bias = jax.random.uniform(
        kb, (out_features,), jnp.float32, minval=-stdv, maxval=stdv)
    x = jax.random.normal(kx, (B, node_n, in_features), jnp.float32)

    def ref_fwd(xx, ww, aa, bb=None):
        sup = jnp.matmul(xx, ww, precision=jax.lax.Precision.HIGHEST)
        yy = jnp.matmul(aa, sup, precision=jax.lax.Precision.HIGHEST)
        return yy if bb is None else yy + bb

    # ---- f32 path: same association as the PyTorch module, tight tolerance.
    y_ref = ref_fwd(x, weight, att, bias)
    y = jax.block_until_ready(graph_convolution(x, weight, att, bias))
    assert y.shape == (B, node_n, out_features)
    assert jnp.allclose(y, y_ref, atol=1e-4, rtol=1e-4), \
        f"f32 max err {float(jnp.max(jnp.abs(y - y_ref)))}"

    # ---- bf16 MXU-input path (x/W bf16 once; att matmul + accum stay f32).
    y_bf16 = jax.block_until_ready(
        graph_convolution(x, weight, att, bias, compute_dtype=jnp.bfloat16))
    assert y_bf16.shape == (B, node_n, out_features)
    assert jnp.allclose(y_bf16, y_ref, atol=1e-2, rtol=1e-2), \
        f"bf16 max err {float(jnp.max(jnp.abs(y_bf16 - y_ref)))}"

    # ---- non-divisible batch + bias=None: exercises the cdiv grid's masked
    #      partial last block and the bias-free kernel variant.
    B2 = 5
    x2 = jax.random.normal(kx2, (B2, node_n, in_features), jnp.float32)
    y2_ref = ref_fwd(x2, weight, att)
    y2 = jax.block_until_ready(
        graph_convolution(x2, weight, att, None, batch_block=2))
    assert y2.shape == (B2, node_n, out_features)
    assert jnp.allclose(y2, y2_ref, atol=1e-4, rtol=1e-4), \
        f"f32 (partial block) max err {float(jnp.max(jnp.abs(y2 - y2_ref)))}"

    print("KERNEL_OK")
</pallas_src>

<mosaic_0001>
module attributes {stable_mosaic.version = 11 : i64} {
  func.func @kernel(%arg0: i32, %arg1: memref<1x48x32xf32, #tpu.memory_space<vmem>>, %arg2: memref<48x48xf32, #tpu.memory_space<vmem>>, %arg3: memref<32x64xf32, #tpu.memory_space<vmem>>, %arg4: memref<1x64xf32, #tpu.memory_space<vmem>>, %arg5: memref<1x48x64xf32, #tpu.memory_space<vmem>>, %arg6: memref<1x48x64xf32, #tpu.memory_space<vmem>>) attributes {dimension_semantics = [#tpu.dimension_semantics<parallel>], iteration_bounds = array<i64: 2>, scalar_prefetch = 0 : i64, scratch_operands = 1 : i64, tpu.core_type = #tpu.core_type<tc>, window_params = [{transform_indices = @transform_0, window_bounds = array<i64: 1, 48, 32>}, {pipeline_mode = #tpu.pipeline_mode<synchronous>, transform_indices = @transform_1, window_bounds = array<i64: 48, 48>}, {pipeline_mode = #tpu.pipeline_mode<synchronous>, transform_indices = @transform_2, window_bounds = array<i64: 32, 64>}, {pipeline_mode = #tpu.pipeline_mode<synchronous>, transform_indices = @transform_3, window_bounds = array<i64: 1, 64>}, {transform_indices = @transform_4, window_bounds = array<i64: 1, 48, 64>}]} {
    %c0 = arith.constant 0 : index
    %c0_0 = arith.constant 0 : index
    %c0_1 = arith.constant 0 : index
    %0 = vector.load %arg1[%c0, %c0_0, %c0_1] : memref<1x48x32xf32, #tpu.memory_space<vmem>>, vector<1x48x32xf32>
    %1 = vector.shape_cast %0 : vector<1x48x32xf32> to vector<48x32xf32>
    %c0_2 = arith.constant 0 : index
    %c0_3 = arith.constant 0 : index
    %2 = vector.load %arg3[%c0_2, %c0_3] : memref<32x64xf32, #tpu.memory_space<vmem>>, vector<32x64xf32>
    %cst = arith.constant dense<0.000000e+00> : vector<48x64xf32>
    %3 = tpu.matmul %1, %2, %cst {dimension_numbers = #tpu.dot_dimension_numbers<[1], [0], [0], [1], [0, 0, 1, 1], [], []>, precision = #tpu.contract_precision<fp32>} : vector<48x32xf32>, vector<32x64xf32>, vector<48x64xf32> -> vector<48x64xf32>
    %4 = vector.shape_cast %3 : vector<48x64xf32> to vector<1x48x64xf32>
    %c0_4 = arith.constant 0 : index
    %c0_5 = arith.constant 0 : index
    %c0_6 = arith.constant 0 : index
    %5 = vector.load %arg6[%c0_4, %c0_5, %c0_6] : memref<1x48x64xf32, #tpu.memory_space<vmem>>, vector<1x48x64xf32>
    tpu.vector_store %arg6[%c0_4, %c0_5, %c0_6], %4 {strides = array<i32>} : memref<1x48x64xf32, #tpu.memory_space<vmem>>, vector<1x48x64xf32>,
    %c0_7 = arith.constant 0 : index
    %c0_8 = arith.constant 0 : index
    %6 = vector.load %arg2[%c0_7, %c0_8] : memref<48x48xf32, #tpu.memory_space<vmem>>, vector<48x48xf32>
    %c0_9 = arith.constant 0 : index
    %c0_10 = arith.constant 0 : index
    %7 = vector.load %arg4[%c0_9, %c0_10] : memref<1x64xf32, #tpu.memory_space<vmem>>, vector<1x64xf32>
    %c0_i32 = arith.constant 0 : i32
    %c1_i32 = arith.constant 1 : i32
    %8 = arith.muli %c0_i32, %c1_i32 : i32
    %c0_i32_11 = arith.constant 0 : i32
    %9 = arith.addi %c0_i32_11, %8 : i32
    %10 = arith.index_cast %9 : i32 to index
    %c0_12 = arith.constant 0 : index
    %c0_13 = arith.constant 0 : index
    %11 = vector.load %arg6[%10, %c0_12, %c0_13] : memref<1x48x64xf32, #tpu.memory_space<vmem>>, vector<1x48x64xf32>
    %12 = vector.shape_cast %11 : vector<1x48x64xf32> to vector<48x64xf32>
    %cst_14 = arith.constant dense<0.000000e+00> : vector<48x64xf32>
    %13 = tpu.matmul %6, %12, %cst_14 {dimension_numbers = #tpu.dot_dimension_numbers<[1], [0], [0], [1], [0, 0, 1, 1], [], []>, precision = #tpu.contract_precision<fp32>} : vector<48x48xf32>, vector<48x64xf32>, vector<48x64xf32> -> vector<48x64xf32>
    %14 = vector.broadcast %7 : vector<1x64xf32> to vector<48x64xf32>
    %15 = arith.addf %13, %14 : vector<48x64xf32>
    %16 = arith.index_cast %9 : i32 to index
    %c0_15 = arith.constant 0 : index
    %c0_16 = arith.constant 0 : index
    %17 = vector.load %arg5[%16, %c0_15, %c0_16] : memref<1x48x64xf32, #tpu.memory_space<vmem>>, vector<1x48x64xf32>
    %18 = vector.shape_cast %17 : vector<1x48x64xf32> to vector<48x64xf32>
    %19 = vector.shape_cast %15 : vector<48x64xf32> to vector<1x48x64xf32>
    tpu.vector_store %arg5[%16, %c0_15, %c0_16], %19 {strides = array<i32>} : memref<1x48x64xf32, #tpu.memory_space<vmem>>, vector<1x48x64xf32>,
    %c1_i32_17 = arith.constant 1 : i32
    return
  }
  func.func @transform_0(%arg0: i32) -> (i32, i32, i32) {
    %c0_i32 = arith.constant 0 : i32
    %c0_i32_0 = arith.constant 0 : i32
    %c0_i32_1 = arith.constant 0 : i32
    return %arg0, %c0_i32, %c0_i32_0 : i32, i32, i32
  }
  func.func @transform_1(%arg0: i32) -> (i32, i32) {
    %c0_i32 = arith.constant 0 : i32
    %c0_i32_0 = arith.constant 0 : i32
    %c0_i32_1 = arith.constant 0 : i32
    return %c0_i32, %c0_i32_0 : i32, i32
  }
  func.func @transform_2(%arg0: i32) -> (i32, i32) {
    %c0_i32 = arith.constant 0 : i32
    %c0_i32_0 = arith.constant 0 : i32
    %c0_i32_1 = arith.constant 0 : i32
    return %c0_i32, %c0_i32_0 : i32, i32
  }
  func.func @transform_3(%arg0: i32) -> (i32, i32) {
    %c0_i32 = arith.constant 0 : i32
    %c0_i32_0 = arith.constant 0 : i32
    %c0_i32_1 = arith.constant 0 : i32
    return %c0_i32, %c0_i32_0 : i32, i32
  }
  func.func @transform_4(%arg0: i32) -> (i32, i32, i32) {
    %c0_i32 = arith.constant 0 : i32
    %c0_i32_0 = arith.constant 0 : i32
    %c0_i32_1 = arith.constant 0 : i32
    return %arg0, %c0_i32, %c0_i32_0 : i32, i32, i32
  }
}

</mosaic_0001>

<llo_original>
// kernel: tpu_custom_call.1
$region0: #{tpu_custom_call.1}
  #allocation0 [shape = 'u32[]', space=smem, size = 0x4, offset = 0x4, fixed_abs, tag = 'smem constant byte address 0x4 - core index']
  #allocation1 [shape = 'u32[72,128]{1,0:T(1,128)}', space=vmem, size = 0x9000, scoped, tag = 'internal scratch']
  #allocation2 [shape = 'f32[1,48,64]{2,1,0:T(8,128)}', space=vmem, size = 0x6000, scoped, tag = 'scratch operand']
  %s0 = inlined_call_operand.vmem [shape: f32[2,48,32], index: 0, kind: input, shape index: {}]
  %s1 = inlined_call_operand.vmem [shape: f32[48,48], index: 1, kind: input, shape index: {}]
  %s2 = inlined_call_operand.vmem [shape: f32[32,64], index: 2, kind: input, shape index: {}]
  %s3 = inlined_call_operand.vmem [shape: f32[1,64], index: 3, kind: input, shape index: {}]
  %s4 = inlined_call_operand.hbm [shape: f32[2,48,64], index: 4, kind: output, shape index: {}]
  %s5 = sld [smem:[#allocation0]]
  $region49: #{tpu_custom_call.1} parent=0
    _
  %s7 = ssub.s32 1, %s5
  %s8 = scalar_select 0, %s7, %s5
  $region1: #{tpu_custom_call.1} parent=0
    #allocation3 [shape = 'u8[49152]{0}', space=vmem, size = 0xc000, scoped, tag = 'output window, operand 0']
    #allocation4 [shape = 's32[2]{0}', space=sflag, size = 0x8, scoped, tag = 'scoped memory for tpu_custom_call.1']
    %9 = vsyncpa [#allocation4], 0
    %s10 = scalar_lea.sflag [#allocation4], 1
    %11 = vsyncpa %s10, 0
    loop: start=0, step=1, limit=4
    $region2: #{tpu_custom_call.1} parent=1 // loop_pre_header
      _
    $region3: #{tpu_custom_call.1} parent=1 // loop_header
      %s13 = sphi 0, %s17
      %p14 = scmp.ge.s32.totalorder %s13, 4
      %s23 = sphi 0, %s25
      %s26 = sphi 0, %s23
      %s27 = sphi 0, %s26
      %s43 = sphi 0, %s27
      %s47 = sphi 0, %s47
      %s49 = sphi 0, %s47
      %s50 = sphi 0, %s49
      %s64 = sphi 0, %s50
      %s68 = sphi 0, %s68
      %s70 = sphi 0, %s68
      %s71 = sphi 0, %s70
      %s85 = sphi 0, %s71
      %s89 = sphi 0, %s89
      %s91 = sphi 0, %s89
      %s92 = sphi 0, %s91
      %s106 = sphi 0, %s92
      %s112 = sphi 0, %s114
      %s115 = sphi 0, %s112
      %s116 = sphi 0, %s115
      %s132 = sphi 0, %s116
    $region4: #{tpu_custom_call.1} parent=1 // loop_header_branch
      %16 = sbr.rel (%p14) target = $region8
    $region5: #{tpu_custom_call.1} parent=1 // loop_body
      %s18 = ssub.s32 %s13, 1
      %s19 = ssub.s32 %s13, 2
      %s20 = sadd.s32 %s13, 1
      %s21 = ssub.s32 %s13, %s20
      %p22 = scmp.eq.s32.totalorder %s21, 0
      %s24 = sadd.s32 %s23, 1
      %s25 = scalar_select %p22, %s23, %s24
      %p28 = pneg %p22
      %p29 = scmp.eq.s32.totalorder %s13, 1
      %p30 = por %p28, %p29
      %p31 = scmp.ne.s32.totalorder %s23, %s26
      %p32 = scmp.eq.s32.totalorder %s13, 0
      %p33 = por %p31, %p32
      %p34 = scmp.ne.s32.totalorder %s23, %s26
      %p35 = scmp.eq.s32.totalorder %s18, 1
      %p36 = por %p34, %p35
      %p37 = scmp.ne.s32.totalorder %s26, %s27
      %p38 = scmp.eq.s32.totalorder %s18, 0
      %p39 = por %p37, %p38
      %p40 = scmp.ne.s32.totalorder %s26, %s27
      %p41 = scmp.eq.s32.totalorder %s19, 1
      %p42 = por %p40, %p41
      %p44 = scmp.ne.s32.totalorder %s27, %s43
      %p45 = scmp.eq.s32.totalorder %s19, 0
      %p46 = por %p44, %p45
      %s48 = sadd.s32 %s47, 1
      %p51 = scmp.eq.s32.totalorder %s13, 1
      %p52 = scmp.ne.s32.totalorder %s47, %s49
      %p53 = scmp.eq.s32.totalorder %s13, 0
      %p54 = por %p52, %p53
      %p55 = scmp.ne.s32.totalorder %s47, %s49
      %p56 = scmp.eq.s32.totalorder %s18, 1
      %p57 = por %p55, %p56
      %p58 = scmp.ne.s32.totalorder %s49, %s50
      %p59 = scmp.eq.s32.totalorder %s18, 0
      %p60 = por %p58, %p59
      %p61 = scmp.ne.s32.totalorder %s49, %s50
      %p62 = scmp.eq.s32.totalorder %s19, 1
      %p63 = por %p61, %p62
      %p65 = scmp.ne.s32.totalorder %s50, %s64
      %p66 = scmp.eq.s32.totalorder %s19, 0
      %p67 = por %p65, %p66
      %s69 = sadd.s32 %s68, 1
      %p72 = scmp.eq.s32.totalorder %s13, 1
      %p73 = scmp.ne.s32.totalorder %s68, %s70
      %p74 = scmp.eq.s32.totalorder %s13, 0
      %p75 = por %p73, %p74
      %p76 = scmp.ne.s32.totalorder %s68, %s70
      %p77 = scmp.eq.s32.totalorder %s18, 1
      %p78 = por %p76, %p77
      %p79 = scmp.ne.s32.totalorder %s70, %s71
      %p80 = scmp.eq.s32.totalorder %s18, 0
      %p81 = por %p79, %p80
      %p82 = scmp.ne.s32.totalorder %s70, %s71
      %p83 = scmp.eq.s32.totalorder %s19, 1
      %p84 = por %p82, %p83
      %p86 = scmp.ne.s32.totalorder %s71, %s85
      %p87 = scmp.eq.s32.totalorder %s19, 0
      %p88 = por %p86, %p87
      %s90 = sadd.s32 %s89, 1
      %p93 = scmp.eq.s32.totalorder %s13, 1
      %p94 = scmp.ne.s32.totalorder %s89, %s91
      %p95 = scmp.eq.s32.totalorder %s13, 0
      %p96 = por %p94, %p95
      %p97 = scmp.ne.s32.totalorder %s89, %s91
      %p98 = scmp.eq.s32.totalorder %s18, 1
      %p99 = por %p97, %p98
      %p100 = scmp.ne.s32.totalorder %s91, %s92
      %p101 = scmp.eq.s32.totalorder %s18, 0
      %p102 = por %p100, %p101
      %p103 = scmp.ne.s32.totalorder %s91, %s92
      %p104 = scmp.eq.s32.totalorder %s19, 1
      %p105 = por %p103, %p104
      %p107 = scmp.ne.s32.totalorder %s92, %s106
      %p108 = scmp.eq.s32.totalorder %s19, 0
      %p109 = por %p107, %p108
      %s110 = ssub.s32 %s13, %s20
      %p111 = scmp.eq.s32.totalorder %s110, 0
      %s113 = sadd.s32 %s112, 1
      %s114 = scalar_select %p111, %s112, %s113
      %p117 = pneg %p111
      %p118 = scmp.eq.s32.totalorder %s13, 1
      %p119 = por %p117, %p118
      %p120 = scmp.ne.s32.totalorder %s112, %s115
      %p121 = scmp.eq.s32.totalorder %s13, 0
      %p122 = por %p120, %p121
      %p123 = scmp.ne.s32.totalorder %s112, %s115
      %p124 = scmp.eq.s32.totalorder %s18, 1
      %p125 = por %p123, %p124
      %p126 = scmp.ne.s32.totalorder %s115, %s116
      %p127 = scmp.eq.s32.totalorder %s18, 0
      %p128 = por %p126, %p127
      %p129 = scmp.ne.s32.totalorder %s115, %s116
      %p130 = scmp.eq.s32.totalorder %s19, 1
      %p131 = por %p129, %p130
      %p133 = scmp.ne.s32.totalorder %s116, %s132
      %p134 = scmp.eq.s32.totalorder %s19, 0
      %p135 = por %p133, %p134
      %p136 = scmp.le.s32.totalorder 1, %s13
      %p137 = scmp.lt.s32.totalorder %s13, 3
      %p138 = pnand %p136, %p137
      %p139 = pneg %p138
      // Predicated region
      $region9: #{tpu_custom_call.1} parent=5 // pred_check
        _
      $region10: #{tpu_custom_call.1} parent=5 // pred_check_branch
        %141 = sbr.rel (%p138) target = $region12
      $region11: #{tpu_custom_call.1} parent=5 // pred_region
        %s142 = ssub.s32 %s13, 1
        // Predicated region
        $region13: #{tpu_custom_call.1} parent=11 // pred_check
          %p143 = pneg %p60
        $region14: #{tpu_custom_call.1} parent=11 // pred_check_branch
          %145 = sbr.rel (%p143) target = $region16
        $region15: #{tpu_custom_call.1} parent=11 // pred_region
          _
        $region16: #{tpu_custom_call.1} parent=11 // pred_fallthru
          _
        // Predicated region
        $region17: #{tpu_custom_call.1} parent=11 // pred_check
          %p146 = pneg %p81
        $region18: #{tpu_custom_call.1} parent=11 // pred_check_branch
          %148 = sbr.rel (%p146) target = $region20
        $region19: #{tpu_custom_call.1} parent=11 // pred_region
          _
        $region20: #{tpu_custom_call.1} parent=11 // pred_fallthru
          _
        // Predicated region
        $region21: #{tpu_custom_call.1} parent=11 // pred_check
          %p149 = pneg %p102
        $region22: #{tpu_custom_call.1} parent=11 // pred_check_branch
          %151 = sbr.rel (%p149) target = $region24
        $region23: #{tpu_custom_call.1} parent=11 // pred_region
          _
        $region24: #{tpu_custom_call.1} parent=11 // pred_fallthru
          _
      $region12: #{tpu_custom_call.1} parent=5 // pred_fallthru
        _
      %p152 = scmp.lt.s32.totalorder %s13, 2
      // Predicated region
      $region25: #{tpu_custom_call.1} parent=5 // pred_check
        %p153 = pneg %p152
      $region26: #{tpu_custom_call.1} parent=5 // pred_check_branch
        %155 = sbr.rel (%p153) target = $region28
      $region27: #{tpu_custom_call.1} parent=5 // pred_region
        // Predicated region
        $region29: #{tpu_custom_call.1} parent=27 // pred_check
          %p156 = pneg %p33
        $region30: #{tpu_custom_call.1} parent=27 // pred_check_branch
          %158 = sbr.rel (%p156) target = $region32
        $region31: #{tpu_custom_call.1} parent=27 // pred_region
          %p159 = scmp.lt.s32.totalorder %s13, 1
          %s160 = scalar_select %p159, %s13, 1
          %s161 = smul.addr %s160, 6
          %s162 = smul.addr %s161, 8
          %s163 = scalar_lea.vmem %s0, %s162
        $region32: #{tpu_custom_call.1} parent=27 // pred_fallthru
          _
      $region28: #{tpu_custom_call.1} parent=5 // pred_fallthru
        _
      %p164 = scmp.le.s32.totalorder 1, %s13
      %p165 = scmp.lt.s32.totalorder %s13, 3
      %p166 = pnand %p164, %p165
      %p167 = pneg %p166
      // Predicated region
      $region33: #{tpu_custom_call.1} parent=5 // pred_check
        _
      $region34: #{tpu_custom_call.1} parent=5 // pred_check_branch
        %169 = sbr.rel (%p166) target = $region36
      $region35: #{tpu_custom_call.1} parent=5 // pred_region
        %s170 = ssub.s32 %s13, 1
        %p171 = scmp.lt.s32.totalorder %s18, 1
        %s172 = scalar_select %p171, %s18, 1
        %s173 = smul.addr %s172, 6
        %s174 = smul.addr %s173, 8
        %s175 = scalar_lea.vmem %s0, %s174
        %p176 = pneg %p39
        %p177 = pneg %p36
        %p178 = pneg %p60
        %p179 = pneg %p57
        %p180 = pneg %p81
        %p181 = pneg %p78
        %p182 = pneg %p102
        %p183 = pneg %p99
        %p184 = pneg %p128
        %p185 = pneg %p125
        %s186 = sand.u32 %s115, 1
        %s187 = scalar_lea.sflag [#allocation4], %s186
        %s188 = sand.u32 %s115, 1
        %s189 = smul.addr %s188, 48
        %s190 = scalar_lea.vmem [#allocation3], %s189
        %p191 = scmp.lt.s32.totalorder %s18, 1
        %s192 = scalar_select %p191, %s18, 1
        %s193 = smul.addr %s192, 6
        %s194 = smul.addr %s193, 8
        %s195 = scalar_lea.vmem %s0, %s194
        %v196 = vld [vmem:[%s195] sm:$0xff]
        %v197 = vld [vmem:[%s195 + $0x8] sm:$0xff]
        %v198 = vld [vmem:[%s195 + $0x10] sm:$0xff]
        %v199 = vld [vmem:[%s195 + $0x18] sm:$0xff]
        %v200 = vld [vmem:[%s195 + $0x20] sm:$0xff]
        %v201 = vld [vmem:[%s195 + $0x28] sm:$0xff]
        %v202 = vld [vmem:[%s2] sm:$0xff]
        %v203 = vld [vmem:[%s2 + $0x8] sm:$0xff]
        %v204 = vld [vmem:[%s2 + $0x10] sm:$0xff]
        %v205 = vld [vmem:[%s2 + $0x18] sm:$0xff]
        %vm206 = vcmask 261120
        %v208 = vsel %vm206, %v196, 0
        %v211 = vsel %vm206, %v197, 0
        %v214 = vsel %vm206, %v198, 0
        %v217 = vsel %vm206, %v199, 0
        %v220 = vsel %vm206, %v200, 0
        %v223 = vsel %vm206, %v201, 0
        %225 = vmatpush.msra.mxu0 0.0
        %226 = vmatpush.msra.mxu0 0.0
        %227 = vmatpush.msra.mxu0 0.0
        %228 = vmatpush.msra.mxu0 0.0
        %229 = vmatpush.msra.mxu0 0.0
        %230 = vmatpush.msra.mxu0 0.0
        %231 = vmatpush.msra.mxu0 0.0
        %232 = vmatpush.msra.mxu0 0.0
        %233 = vmatpush.msra.mxu0 0.0
        %234 = vmatpush.msra.mxu0 0.0
        %235 = vmatpush.msra.mxu0 0.0
        %236 = vmatpush.msra.mxu0 0.0
        %v237 = vand.u32 %v205, 4294901760
        %238 = vmatpush.msra.mxu0 %v237
        %v239 = vand.u32 %v204, 4294901760
        %240 = vmatpush.msra.mxu0 %v239
        %v241 = vand.u32 %v203, 4294901760
        %242 = vmatpush.msra.mxu0 %v241
        %v243 = vand.u32 %v202, 4294901760
        %244 = vmatpush.msra.mxu0 %v243
        %v245 = vand.u32 %v208, 4294901760
        %v246 = vsub.f32 %v208, %v245
        %v247 = vand.u32 %v246, 4294901760
        %v248 = vsub.f32 %v246, %v247
        %v249 = vand.u32 %v248, 4294901760
        %250 = vmatmul.f32.gmra.mxu0 %v249
        %v251 = vpop.f32.mrf.mxu0
        %v252 = vadd.f32 0.0, %v251
        %v253 = vand.u32 %v211, 4294901760
        %v254 = vsub.f32 %v211, %v253
        %v255 = vand.u32 %v254, 4294901760
        %v256 = vsub.f32 %v254, %v255
        %v257 = vand.u32 %v256, 4294901760
        %258 = vmatmul.f32.gmra.mxu0 %v257
        %v259 = vpop.f32.mrf.mxu0
        %v260 = vadd.f32 0.0, %v259
        %v261 = vand.u32 %v214, 4294901760
        %v262 = vsub.f32 %v214, %v261
        %v263 = vand.u32 %v262, 4294901760
        %v264 = vsub.f32 %v262, %v263
        %v265 = vand.u32 %v264, 4294901760
        %266 = vmatmul.f32.gmra.mxu0 %v265
        %v267 = vpop.f32.mrf.mxu0
        %v268 = vadd.f32 0.0, %v267
        %v269 = vand.u32 %v217, 4294901760
        %v270 = vsub.f32 %v217, %v269
        %v271 = vand.u32 %v270, 4294901760
        %v272 = vsub.f32 %v270, %v271
        %v273 = vand.u32 %v272, 4294901760
        %274 = vmatmul.f32.gmra.mxu0 %v273
        %v275 = vpop.f32.mrf.mxu0
        %v276 = vadd.f32 0.0, %v275
        %v277 = vand.u32 %v220, 4294901760
        %v278 = vsub.f32 %v220, %v277
        %v279 = vand.u32 %v278, 4294901760
        %v280 = vsub.f32 %v278, %v279
        %v281 = vand.u32 %v280, 4294901760
        %282 = vmatmul.f32.gmra.mxu0 %v281
        %v283 = vpop.f32.mrf.mxu0
        %v284 = vadd.f32 0.0, %v283
        %v285 = vand.u32 %v223, 4294901760
        %v286 = vsub.f32 %v223, %v285
        %v287 = vand.u32 %v286, 4294901760
        %v288 = vsub.f32 %v286, %v287
        %v289 = vand.u32 %v288, 4294901760
        %290 = vmatmul.f32.gmra.mxu0 %v289
        %v291 = vpop.f32.mrf.mxu0
        %v292 = vadd.f32 0.0, %v291
        %293 = vdwg.mxu0
        %294 = vmatpush.msra.mxu0 0.0
        %295 = vmatpush.msra.mxu0 0.0
        %296 = vmatpush.msra.mxu0 0.0
        %297 = vmatpush.msra.mxu0 0.0
        %298 = vmatpush.msra.mxu0 0.0
        %299 = vmatpush.msra.mxu0 0.0
        %300 = vmatpush.msra.mxu0 0.0
        %301 = vmatpush.msra.mxu0 0.0
        %302 = vmatpush.msra.mxu0 0.0
        %303 = vmatpush.msra.mxu0 0.0
        %304 = vmatpush.msra.mxu0 0.0
        %305 = vmatpush.msra.mxu0 0.0
        %v306 = vand.u32 %v205, 4294901760
        %v307 = vsub.f32 %v205, %v306
        %v308 = vand.u32 %v307, 4294901760
        %v309 = vsub.f32 %v307, %v308
        %v310 = vand.u32 %v309, 4294901760
        %311 = vmatpush.msra.mxu0 %v310
        %v312 = vand.u32 %v204, 4294901760
        %v313 = vsub.f32 %v204, %v312
        %v314 = vand.u32 %v313, 4294901760
        %v315 = vsub.f32 %v313, %v314
        %v316 = vand.u32 %v315, 4294901760
        %317 = vmatpush.msra.mxu0 %v316
        %v318 = vand.u32 %v203, 4294901760
        %v319 = vsub.f32 %v203, %v318
        %v320 = vand.u32 %v319, 4294901760
        %v321 = vsub.f32 %v319, %v320
        %v322 = vand.u32 %v321, 4294901760
        %323 = vmatpush.msra.mxu0 %v322
        %v324 = vand.u32 %v202, 4294901760
        %v325 = vsub.f32 %v202, %v324
        %v326 = vand.u32 %v325, 4294901760
        %v327 = vsub.f32 %v325, %v326
        %v328 = vand.u32 %v327, 4294901760
        %329 = vmatpush.msra.mxu0 %v328
        %v330 = vand.u32 %v208, 4294901760
        %331 = vmatmul.f32.gmra.mxu0 %v330
        %v332 = vpop.f32.mrf.mxu0
        %v333 = vadd.f32 %v252, %v332
        %v334 = vand.u32 %v211, 4294901760
        %335 = vmatmul.f32.gmra.mxu0 %v334
        %v336 = vpop.f32.mrf.mxu0
        %v337 = vadd.f32 %v260, %v336
        %v338 = vand.u32 %v214, 4294901760
        %339 = vmatmul.f32.gmra.mxu0 %v338
        %v340 = vpop.f32.mrf.mxu0
        %v341 = vadd.f32 %v268, %v340
        %v342 = vand.u32 %v217, 4294901760
        %343 = vmatmul.f32.gmra.mxu0 %v342
        %v344 = vpop.f32.mrf.mxu0
        %v345 = vadd.f32 %v276, %v344
        %v346 = vand.u32 %v220, 4294901760
        %347 = vmatmul.f32.gmra.mxu0 %v346
        %v348 = vpop.f32.mrf.mxu0
        %v349 = vadd.f32 %v284, %v348
        %v350 = vand.u32 %v223, 4294901760
        %351 = vmatmul.f32.gmra.mxu0 %v350
        %v352 = vpop.f32.mrf.mxu0
        %v353 = vadd.f32 %v292, %v352
        %354 = vdwg.mxu0
        %355 = vmatpush.msra.mxu0 0.0
        %356 = vmatpush.msra.mxu0 0.0
        %357 = vmatpush.msra.mxu0 0.0
        %358 = vmatpush.msra.mxu0 0.0
        %359 = vmatpush.msra.mxu0 0.0
        %360 = vmatpush.msra.mxu0 0.0
        %361 = vmatpush.msra.mxu0 0.0
        %362 = vmatpush.msra.mxu0 0.0
        %363 = vmatpush.msra.mxu0 0.0
        %364 = vmatpush.msra.mxu0 0.0
        %365 = vmatpush.msra.mxu0 0.0
        %366 = vmatpush.msra.mxu0 0.0
        %v367 = vand.u32 %v205, 4294901760
        %v368 = vsub.f32 %v205, %v367
        %369 = vmatpush.msra.mxu0 %v368
        %v370 = vand.u32 %v204, 4294901760
        %v371 = vsub.f32 %v204, %v370
        %372 = vmatpush.msra.mxu0 %v371
        %v373 = vand.u32 %v203, 4294901760
        %v374 = vsub.f32 %v203, %v373
        %375 = vmatpush.msra.mxu0 %v374
        %v376 = vand.u32 %v202, 4294901760
        %v377 = vsub.f32 %v202, %v376
        %378 = vmatpush.msra.mxu0 %v377
        %v379 = vand.u32 %v208, 4294901760
        %v380 = vsub.f32 %v208, %v379
        %381 = vmatmul.f32.gmra.mxu0 %v380
        %v382 = vpop.f32.mrf.mxu0
        %v383 = vadd.f32 %v333, %v382
        %v384 = vand.u32 %v211, 4294901760
        %v385 = vsub.f32 %v211, %v384
        %386 = vmatmul.f32.gmra.mxu0 %v385
        %v387 = vpop.f32.mrf.mxu0
        %v388 = vadd.f32 %v337, %v387
        %v389 = vand.u32 %v214, 4294901760
        %v390 = vsub.f32 %v214, %v389
        %391 = vmatmul.f32.gmra.mxu0 %v390
        %v392 = vpop.f32.mrf.mxu0
        %v393 = vadd.f32 %v341, %v392
        %v394 = vand.u32 %v217, 4294901760
        %v395 = vsub.f32 %v217, %v394
        %396 = vmatmul.f32.gmra.mxu0 %v395
        %v397 = vpop.f32.mrf.mxu0
        %v398 = vadd.f32 %v345, %v397
        %v399 = vand.u32 %v220, 4294901760
        %v400 = vsub.f32 %v220, %v399
        %401 = vmatmul.f32.gmra.mxu0 %v400
        %v402 = vpop.f32.mrf.mxu0
        %v403 = vadd.f32 %v349, %v402
        %v404 = vand.u32 %v223, 4294901760
        %v405 = vsub.f32 %v223, %v404
        %406 = vmatmul.f32.gmra.mxu0 %v405
        %v407 = vpop.f32.mrf.mxu0
        %v408 = vadd.f32 %v353, %v407
        %409 = vdwg.mxu0
        %410 = vmatpush.msra.mxu0 0.0
        %411 = vmatpush.msra.mxu0 0.0
        %412 = vmatpush.msra.mxu0 0.0
        %413 = vmatpush.msra.mxu0 0.0
        %414 = vmatpush.msra.mxu0 0.0
        %415 = vmatpush.msra.mxu0 0.0
        %416 = vmatpush.msra.mxu0 0.0
        %417 = vmatpush.msra.mxu0 0.0
        %418 = vmatpush.msra.mxu0 0.0
        %419 = vmatpush.msra.mxu0 0.0
        %420 = vmatpush.msra.mxu0 0.0
        %421 = vmatpush.msra.mxu0 0.0
        %v422 = vand.u32 %v205, 4294901760
        %423 = vmatpush.msra.mxu0 %v422
        %v424 = vand.u32 %v204, 4294901760
        %425 = vmatpush.msra.mxu0 %v424
        %v426 = vand.u32 %v203, 4294901760
        %427 = vmatpush.msra.mxu0 %v426
        %v428 = vand.u32 %v202, 4294901760
        %429 = vmatpush.msra.mxu0 %v428
        %v430 = vand.u32 %v208, 4294901760
        %v431 = vsub.f32 %v208, %v430
        %v432 = vand.u32 %v431, 4294901760
        %433 = vmatmul.f32.gmra.mxu0 %v432
        %v434 = vpop.f32.mrf.mxu0
        %v435 = vadd.f32 %v383, %v434
        %v436 = vand.u32 %v211, 4294901760
        %v437 = vsub.f32 %v211, %v436
        %v438 = vand.u32 %v437, 4294901760
        %439 = vmatmul.f32.gmra.mxu0 %v438
        %v440 = vpop.f32.mrf.mxu0
        %v441 = vadd.f32 %v388, %v440
        %v442 = vand.u32 %v214, 4294901760
        %v443 = vsub.f32 %v214, %v442
        %v444 = vand.u32 %v443, 4294901760
        %445 = vmatmul.f32.gmra.mxu0 %v444
        %v446 = vpop.f32.mrf.mxu0
        %v447 = vadd.f32 %v393, %v446
        %v448 = vand.u32 %v217, 4294901760
        %v449 = vsub.f32 %v217, %v448
        %v450 = vand.u32 %v449, 4294901760
        %451 = vmatmul.f32.gmra.mxu0 %v450
        %v452 = vpop.f32.mrf.mxu0
        %v453 = vadd.f32 %v398, %v452
        %v454 = vand.u32 %v220, 4294901760
        %v455 = vsub.f32 %v220, %v454
        %v456 = vand.u32 %v455, 4294901760
        %457 = vmatmul.f32.gmra.mxu0 %v456
        %v458 = vpop.f32.mrf.mxu0
        %v459 = vadd.f32 %v403, %v458
        %v460 = vand.u32 %v223, 4294901760
        %v461 = vsub.f32 %v223, %v460
        %v462 = vand.u32 %v461, 4294901760
        %463 = vmatmul.f32.gmra.mxu0 %v462
        %v464 = vpop.f32.mrf.mxu0
        %v465 = vadd.f32 %v408, %v464
        %466 = vdwg.mxu0
        %467 = vmatpush.msra.mxu0 0.0
        %468 = vmatpush.msra.mxu0 0.0
        %469 = vmatpush.msra.mxu0 0.0
        %470 = vmatpush.msra.mxu0 0.0
        %471 = vmatpush.msra.mxu0 0.0
        %472 = vmatpush.msra.mxu0 0.0
        %473 = vmatpush.msra.mxu0 0.0
        %474 = vmatpush.msra.mxu0 0.0
        %475 = vmatpush.msra.mxu0 0.0
        %476 = vmatpush.msra.mxu0 0.0
        %477 = vmatpush.msra.mxu0 0.0
        %478 = vmatpush.msra.mxu0 0.0
        %v479 = vand.u32 %v205, 4294901760
        %v480 = vsub.f32 %v205, %v479
        %v481 = vand.u32 %v480, 4294901760
        %482 = vmatpush.msra.mxu0 %v481
        %v483 = vand.u32 %v204, 4294901760
        %v484 = vsub.f32 %v204, %v483
        %v485 = vand.u32 %v484, 4294901760
        %486 = vmatpush.msra.mxu0 %v485
        %v487 = vand.u32 %v203, 4294901760
        %v488 = vsub.f32 %v203, %v487
        %v489 = vand.u32 %v488, 4294901760
        %490 = vmatpush.msra.mxu0 %v489
        %v491 = vand.u32 %v202, 4294901760
        %v492 = vsub.f32 %v202, %v491
        %v493 = vand.u32 %v492, 4294901760
        %494 = vmatpush.msra.mxu0 %v493
        %v495 = vand.u32 %v208, 4294901760
        %496 = vmatmul.f32.gmra.mxu0 %v495
        %v497 = vpop.f32.mrf.mxu0
        %v498 = vadd.f32 %v435, %v497
        %v499 = vand.u32 %v211, 4294901760
        %500 = vmatmul.f32.gmra.mxu0 %v499
        %v501 = vpop.f32.mrf.mxu0
        %v502 = vadd.f32 %v441, %v501
        %v503 = vand.u32 %v214, 4294901760
        %504 = vmatmul.f32.gmra.mxu0 %v503
        %v505 = vpop.f32.mrf.mxu0
        %v506 = vadd.f32 %v447, %v505
        %v507 = vand.u32 %v217, 4294901760
        %508 = vmatmul.f32.gmra.mxu0 %v507
        %v509 = vpop.f32.mrf.mxu0
        %v510 = vadd.f32 %v453, %v509
        %v511 = vand.u32 %v220, 4294901760
        %512 = vmatmul.f32.gmra.mxu0 %v511
        %v513 = vpop.f32.mrf.mxu0
        %v514 = vadd.f32 %v459, %v513
        %v515 = vand.u32 %v223, 4294901760
        %516 = vmatmul.f32.gmra.mxu0 %v515
        %v517 = vpop.f32.mrf.mxu0
        %v518 = vadd.f32 %v465, %v517
        %519 = vdwg.mxu0
        %520 = vmatpush.msra.mxu0 0.0
        %521 = vmatpush.msra.mxu0 0.0
        %522 = vmatpush.msra.mxu0 0.0
        %523 = vmatpush.msra.mxu0 0.0
        %524 = vmatpush.msra.mxu0 0.0
        %525 = vmatpush.msra.mxu0 0.0
        %526 = vmatpush.msra.mxu0 0.0
        %527 = vmatpush.msra.mxu0 0.0
        %528 = vmatpush.msra.mxu0 0.0
        %529 = vmatpush.msra.mxu0 0.0
        %530 = vmatpush.msra.mxu0 0.0
        %531 = vmatpush.msra.mxu0 0.0
        %v532 = vand.u32 %v205, 4294901760
        %533 = vmatpush.msra.mxu0 %v532
        %v534 = vand.u32 %v204, 4294901760
        %535 = vmatpush.msra.mxu0 %v534
        %v536 = vand.u32 %v203, 4294901760
        %537 = vmatpush.msra.mxu0 %v536
        %v538 = vand.u32 %v202, 4294901760
        %539 = vmatpush.msra.mxu0 %v538
        %v540 = vand.u32 %v208, 4294901760
        %541 = vmatmul.f32.gmra.mxu0 %v540
        %v542 = vpop.f32.mrf.mxu0
        %v543 = vadd.f32 %v498, %v542
        %v544 = vand.u32 %v211, 4294901760
        %545 = vmatmul.f32.gmra.mxu0 %v544
        %v546 = vpop.f32.mrf.mxu0
        %v547 = vadd.f32 %v502, %v546
        %v548 = vand.u32 %v214, 4294901760
        %549 = vmatmul.f32.gmra.mxu0 %v548
        %v550 = vpop.f32.mrf.mxu0
        %v551 = vadd.f32 %v506, %v550
        %v552 = vand.u32 %v217, 4294901760
        %553 = vmatmul.f32.gmra.mxu0 %v552
        %v554 = vpop.f32.mrf.mxu0
        %v555 = vadd.f32 %v510, %v554
        %v556 = vand.u32 %v220, 4294901760
        %557 = vmatmul.f32.gmra.mxu0 %v556
        %v558 = vpop.f32.mrf.mxu0
        %v559 = vadd.f32 %v514, %v558
        %v560 = vand.u32 %v223, 4294901760
        %561 = vmatmul.f32.gmra.mxu0 %v560
        %v562 = vpop.f32.mrf.mxu0
        %v563 = vadd.f32 %v518, %v562
        %564 = vdwg.mxu0
        %vm565 = vcmask 523264
        %566 = vst.msk [vmem:[#allocation2] sm:$0xff] %vm565, %v543
        %567 = vst.msk [vmem:[#allocation2 + $0x8] sm:$0xff] %vm565, %v547
        %568 = vst.msk [vmem:[#allocation2 + $0x10] sm:$0xff] %vm565, %v551
        %569 = vst.msk [vmem:[#allocation2 + $0x18] sm:$0xff] %vm565, %v555
        %570 = vst.msk [vmem:[#allocation2 + $0x20] sm:$0xff] %vm565, %v559
        %571 = vst.msk [vmem:[#allocation2 + $0x28] sm:$0xff] %vm565, %v563
        %v572 = vld [vmem:[%s1] sm:$0xff]
        %v573 = vld [vmem:[%s1 + $0x8] sm:$0xff]
        %v574 = vld [vmem:[%s1 + $0x10] sm:$0xff]
        %v575 = vld [vmem:[%s1 + $0x18] sm:$0xff]
        %v576 = vld [vmem:[%s1 + $0x20] sm:$0xff]
        %v577 = vld [vmem:[%s1 + $0x28] sm:$0xff]
        %v578 = vld [vmem:[%s3] sm:$0x1]
        %v579 = vld [vmem:[#allocation2] sm:$0xff]
        %v580 = vld [vmem:[#allocation2 + $0x8] sm:$0xff]
        %v581 = vld [vmem:[#allocation2 + $0x10] sm:$0xff]
        %v582 = vld [vmem:[#allocation2 + $0x18] sm:$0xff]
        %v583 = vld [vmem:[#allocation2 + $0x20] sm:$0xff]
        %v584 = vld [vmem:[#allocation2 + $0x28] sm:$0xff]
        %v586 = vperm.slane %v578, 0
        %vm588 = vcmask 392192
        %v590 = vsel %vm588, %v572, 0
        %v593 = vsel %vm588, %v573, 0
        %v596 = vsel %vm588, %v574, 0
        %v599 = vsel %vm588, %v575, 0
        %v602 = vsel %vm588, %v576, 0
        %v605 = vsel %vm588, %v577, 0
        %607 = vmatpush.msra.mxu0 0.0
        %608 = vmatpush.msra.mxu0 0.0
        %609 = vmatpush.msra.mxu0 0.0
        %610 = vmatpush.msra.mxu0 0.0
        %611 = vmatpush.msra.mxu0 0.0
        %612 = vmatpush.msra.mxu0 0.0
        %613 = vmatpush.msra.mxu0 0.0
        %614 = vmatpush.msra.mxu0 0.0
        %615 = vmatpush.msra.mxu0 0.0
        %616 = vmatpush.msra.mxu0 0.0
        %v617 = vand.u32 %v584, 4294901760
        %618 = vmatpush.msra.mxu0 %v617
        %v619 = vand.u32 %v583, 4294901760
        %620 = vmatpush.msra.mxu0 %v619
        %v621 = vand.u32 %v582, 4294901760
        %622 = vmatpush.msra.mxu0 %v621
        %v623 = vand.u32 %v581, 4294901760
        %624 = vmatpush.msra.mxu0 %v623
        %v625 = vand.u32 %v580, 4294901760
        %626 = vmatpush.msra.mxu0 %v625
        %v627 = vand.u32 %v579, 4294901760
        %628 = vmatpush.msra.mxu0 %v627
        %v629 = vand.u32 %v590, 4294901760
        %v630 = vsub.f32 %v590, %v629
        %v631 = vand.u32 %v630, 4294901760
        %v632 = vsub.f32 %v630, %v631
        %v633 = vand.u32 %v632, 4294901760
        %634 = vmatmul.f32.gmra.mxu0 %v633
        %v635 = vpop.f32.mrf.mxu0
        %v636 = vadd.f32 %v586, %v635
        %v637 = vand.u32 %v593, 4294901760
        %v638 = vsub.f32 %v593, %v637
        %v639 = vand.u32 %v638, 4294901760
        %v640 = vsub.f32 %v638, %v639
        %v641 = vand.u32 %v640, 4294901760
        %642 = vmatmul.f32.gmra.mxu0 %v641
        %v643 = vpop.f32.mrf.mxu0
        %v644 = vadd.f32 %v586, %v643
        %v645 = vand.u32 %v596, 4294901760
        %v646 = vsub.f32 %v596, %v645
        %v647 = vand.u32 %v646, 4294901760
        %v648 = vsub.f32 %v646, %v647
        %v649 = vand.u32 %v648, 4294901760
        %650 = vmatmul.f32.gmra.mxu0 %v649
        %v651 = vpop.f32.mrf.mxu0
        %v652 = vadd.f32 %v586, %v651
        %v653 = vand.u32 %v599, 4294901760
        %v654 = vsub.f32 %v599, %v653
        %v655 = vand.u32 %v654, 4294901760
        %v656 = vsub.f32 %v654, %v655
        %v657 = vand.u32 %v656, 4294901760
        %658 = vmatmul.f32.gmra.mxu0 %v657
        %v659 = vpop.f32.mrf.mxu0
        %v660 = vadd.f32 %v586, %v659
        %v661 = vand.u32 %v602, 4294901760
        %v662 = vsub.f32 %v602, %v661
        %v663 = vand.u32 %v662, 4294901760
        %v664 = vsub.f32 %v662, %v663
        %v665 = vand.u32 %v664, 4294901760
        %666 = vmatmul.f32.gmra.mxu0 %v665
        %v667 = vpop.f32.mrf.mxu0
        %v668 = vadd.f32 %v586, %v667
        %v669 = vand.u32 %v605, 4294901760
        %v670 = vsub.f32 %v605, %v669
        %v671 = vand.u32 %v670, 4294901760
        %v672 = vsub.f32 %v670, %v671
        %v673 = vand.u32 %v672, 4294901760
        %674 = vmatmul.f32.gmra.mxu0 %v673
        %v675 = vpop.f32.mrf.mxu0
        %v676 = vadd.f32 %v586, %v675
        %677 = vdwg.mxu0
        %678 = vmatpush.msra.mxu0 0.0
        %679 = vmatpush.msra.mxu0 0.0
        %680 = vmatpush.msra.mxu0 0.0
        %681 = vmatpush.msra.mxu0 0.0
        %682 = vmatpush.msra.mxu0 0.0
        %683 = vmatpush.msra.mxu0 0.0
        %684 = vmatpush.msra.mxu0 0.0
        %685 = vmatpush.msra.mxu0 0.0
        %686 = vmatpush.msra.mxu0 0.0
        %687 = vmatpush.msra.mxu0 0.0
        %v688 = vand.u32 %v584, 4294901760
        %v689 = vsub.f32 %v584, %v688
        %v690 = vand.u32 %v689, 4294901760
        %v691 = vsub.f32 %v689, %v690
        %v692 = vand.u32 %v691, 4294901760
        %693 = vmatpush.msra.mxu0 %v692
        %v694 = vand.u32 %v583, 4294901760
        %v695 = vsub.f32 %v583, %v694
        %v696 = vand.u32 %v695, 4294901760
        %v697 = vsub.f32 %v695, %v696
        %v698 = vand.u32 %v697, 4294901760
        %699 = vmatpush.msra.mxu0 %v698
        %v700 = vand.u32 %v582, 4294901760
        %v701 = vsub.f32 %v582, %v700
        %v702 = vand.u32 %v701, 4294901760
        %v703 = vsub.f32 %v701, %v702
        %v704 = vand.u32 %v703, 4294901760
        %705 = vmatpush.msra.mxu0 %v704
        %v706 = vand.u32 %v581, 4294901760
        %v707 = vsub.f32 %v581, %v706
        %v708 = vand.u32 %v707, 4294901760
        %v709 = vsub.f32 %v707, %v708
        %v710 = vand.u32 %v709, 4294901760
        %711 = vmatpush.msra.mxu0 %v710
        %v712 = vand.u32 %v580, 4294901760
        %v713 = vsub.f32 %v580, %v712
        %v714 = vand.u32 %v713, 4294901760
        %v715 = vsub.f32 %v713, %v714
        %v716 = vand.u32 %v715, 4294901760
        %717 = vmatpush.msra.mxu0 %v716
        %v718 = vand.u32 %v579, 4294901760
        %v719 = vsub.f32 %v579, %v718
        %v720 = vand.u32 %v719, 4294901760
        %v721 = vsub.f32 %v719, %v720
        %v722 = vand.u32 %v721, 4294901760
        %723 = vmatpush.msra.mxu0 %v722
        %v724 = vand.u32 %v590, 4294901760
        %725 = vmatmul.f32.gmra.mxu0 %v724
        %v726 = vpop.f32.mrf.mxu0
        %v727 = vadd.f32 %v636, %v726
        %v728 = vand.u32 %v593, 4294901760
        %729 = vmatmul.f32.gmra.mxu0 %v728
        %v730 = vpop.f32.mrf.mxu0
        %v731 = vadd.f32 %v644, %v730
        %v732 = vand.u32 %v596, 4294901760
        %733 = vmatmul.f32.gmra.mxu0 %v732
        %v734 = vpop.f32.mrf.mxu0
        %v735 = vadd.f32 %v652, %v734
        %v736 = vand.u32 %v599, 4294901760
        %737 = vmatmul.f32.gmra.mxu0 %v736
        %v738 = vpop.f32.mrf.mxu0
        %v739 = vadd.f32 %v660, %v738
        %v740 = vand.u32 %v602, 4294901760
        %741 = vmatmul.f32.gmra.mxu0 %v740
        %v742 = vpop.f32.mrf.mxu0
        %v743 = vadd.f32 %v668, %v742
        %v744 = vand.u32 %v605, 4294901760
        %745 = vmatmul.f32.gmra.mxu0 %v744
        %v746 = vpop.f32.mrf.mxu0
        %v747 = vadd.f32 %v676, %v746
        %748 = vdwg.mxu0
        %749 = vmatpush.msra.mxu0 0.0
        %750 = vmatpush.msra.mxu0 0.0
        %751 = vmatpush.msra.mxu0 0.0
        %752 = vmatpush.msra.mxu0 0.0
        %753 = vmatpush.msra.mxu0 0.0
        %754 = vmatpush.msra.mxu0 0.0
        %755 = vmatpush.msra.mxu0 0.0
        %756 = vmatpush.msra.mxu0 0.0
        %757 = vmatpush.msra.mxu0 0.0
        %758 = vmatpush.msra.mxu0 0.0
        %v759 = vand.u32 %v584, 4294901760
        %v760 = vsub.f32 %v584, %v759
        %761 = vmatpush.msra.mxu0 %v760
        %v762 = vand.u32 %v583, 4294901760
        %v763 = vsub.f32 %v583, %v762
        %764 = vmatpush.msra.mxu0 %v763
        %v765 = vand.u32 %v582, 4294901760
        %v766 = vsub.f32 %v582, %v765
        %767 = vmatpush.msra.mxu0 %v766
        %v768 = vand.u32 %v581, 4294901760
        %v769 = vsub.f32 %v581, %v768
        %770 = vmatpush.msra.mxu0 %v769
        %v771 = vand.u32 %v580, 4294901760
        %v772 = vsub.f32 %v580, %v771
        %773 = vmatpush.msra.mxu0 %v772
        %v774 = vand.u32 %v579, 4294901760
        %v775 = vsub.f32 %v579, %v774
        %776 = vmatpush.msra.mxu0 %v775
        %v777 = vand.u32 %v590, 4294901760
        %v778 = vsub.f32 %v590, %v777
        %779 = vmatmul.f32.gmra.mxu0 %v778
        %v780 = vpop.f32.mrf.mxu0
        %v781 = vadd.f32 %v727, %v780
        %v782 = vand.u32 %v593, 4294901760
        %v783 = vsub.f32 %v593, %v782
        %784 = vmatmul.f32.gmra.mxu0 %v783
        %v785 = vpop.f32.mrf.mxu0
        %v786 = vadd.f32 %v731, %v785
        %v787 = vand.u32 %v596, 4294901760
        %v788 = vsub.f32 %v596, %v787
        %789 = vmatmul.f32.gmra.mxu0 %v788
        %v790 = vpop.f32.mrf.mxu0
        %v791 = vadd.f32 %v735, %v790
        %v792 = vand.u32 %v599, 4294901760
        %v793 = vsub.f32 %v599, %v792
        %794 = vmatmul.f32.gmra.mxu0 %v793
        %v795 = vpop.f32.mrf.mxu0
        %v796 = vadd.f32 %v739, %v795
        %v797 = vand.u32 %v602, 4294901760
        %v798 = vsub.f32 %v602, %v797
        %799 = vmatmul.f32.gmra.mxu0 %v798
        %v800 = vpop.f32.mrf.mxu0
        %v801 = vadd.f32 %v743, %v800
        %v802 = vand.u32 %v605, 4294901760
        %v803 = vsub.f32 %v605, %v802
        %804 = vmatmul.f32.gmra.mxu0 %v803
        %v805 = vpop.f32.mrf.mxu0
        %v806 = vadd.f32 %v747, %v805
        %807 = vdwg.mxu0
        %808 = vmatpush.msra.mxu0 0.0
        %809 = vmatpush.msra.mxu0 0.0
        %810 = vmatpush.msra.mxu0 0.0
        %811 = vmatpush.msra.mxu0 0.0
        %812 = vmatpush.msra.mxu0 0.0
        %813 = vmatpush.msra.mxu0 0.0
        %814 = vmatpush.msra.mxu0 0.0
        %815 = vmatpush.msra.mxu0 0.0
        %816 = vmatpush.msra.mxu0 0.0
        %817 = vmatpush.msra.mxu0 0.0
        %v818 = vand.u32 %v584, 4294901760
        %819 = vmatpush.msra.mxu0 %v818
        %v820 = vand.u32 %v583, 4294901760
        %821 = vmatpush.msra.mxu0 %v820
        %v822 = vand.u32 %v582, 4294901760
        %823 = vmatpush.msra.mxu0 %v822
        %v824 = vand.u32 %v581, 4294901760
        %825 = vmatpush.msra.mxu0 %v824
        %v826 = vand.u32 %v580, 4294901760
        %827 = vmatpush.msra.mxu0 %v826
        %v828 = vand.u32 %v579, 4294901760
        %829 = vmatpush.msra.mxu0 %v828
        %v830 = vand.u32 %v590, 4294901760
        %v831 = vsub.f32 %v590, %v830
        %v832 = vand.u32 %v831, 4294901760
        %833 = vmatmul.f32.gmra.mxu0 %v832
        %v834 = vpop.f32.mrf.mxu0
        %v835 = vadd.f32 %v781, %v834
        %v836 = vand.u32 %v593, 4294901760
        %v837 = vsub.f32 %v593, %v836
        %v838 = vand.u32 %v837, 4294901760
        %839 = vmatmul.f32.gmra.mxu0 %v838
        %v840 = vpop.f32.mrf.mxu0
        %v841 = vadd.f32 %v786, %v840
        %v842 = vand.u32 %v596, 4294901760
        %v843 = vsub.f32 %v596, %v842
        %v844 = vand.u32 %v843, 4294901760
        %845 = vmatmul.f32.gmra.mxu0 %v844
        %v846 = vpop.f32.mrf.mxu0
        %v847 = vadd.f32 %v791, %v846
        %v848 = vand.u32 %v599, 4294901760
        %v849 = vsub.f32 %v599, %v848
        %v850 = vand.u32 %v849, 4294901760
        %851 = vmatmul.f32.gmra.mxu0 %v850
        %v852 = vpop.f32.mrf.mxu0
        %v853 = vadd.f32 %v796, %v852
        %v854 = vand.u32 %v602, 4294901760
        %v855 = vsub.f32 %v602, %v854
        %v856 = vand.u32 %v855, 4294901760
        %857 = vmatmul.f32.gmra.mxu0 %v856
        %v858 = vpop.f32.mrf.mxu0
        %v859 = vadd.f32 %v801, %v858
        %v860 = vand.u32 %v605, 4294901760
        %v861 = vsub.f32 %v605, %v860
        %v862 = vand.u32 %v861, 4294901760
        %863 = vmatmul.f32.gmra.mxu0 %v862
        %v864 = vpop.f32.mrf.mxu0
        %v865 = vadd.f32 %v806, %v864
        %866 = vdwg.mxu0
        %867 = vmatpush.msra.mxu0 0.0
        %868 = vmatpush.msra.mxu0 0.0
        %869 = vmatpush.msra.mxu0 0.0
        %870 = vmatpush.msra.mxu0 0.0
        %871 = vmatpush.msra.mxu0 0.0
        %872 = vmatpush.msra.mxu0 0.0
        %873 = vmatpush.msra.mxu0 0.0
        %874 = vmatpush.msra.mxu0 0.0
        %875 = vmatpush.msra.mxu0 0.0
        %876 = vmatpush.msra.mxu0 0.0
        %v877 = vand.u32 %v584, 4294901760
        %v878 = vsub.f32 %v584, %v877
        %v879 = vand.u32 %v878, 4294901760
        %880 = vmatpush.msra.mxu0 %v879
        %v881 = vand.u32 %v583, 4294901760
        %v882 = vsub.f32 %v583, %v881
        %v883 = vand.u32 %v882, 4294901760
        %884 = vmatpush.msra.mxu0 %v883
        %v885 = vand.u32 %v582, 4294901760
        %v886 = vsub.f32 %v582, %v885
        %v887 = vand.u32 %v886, 4294901760
        %888 = vmatpush.msra.mxu0 %v887
        %v889 = vand.u32 %v581, 4294901760
        %v890 = vsub.f32 %v581, %v889
        %v891 = vand.u32 %v890, 4294901760
        %892 = vmatpush.msra.mxu0 %v891
        %v893 = vand.u32 %v580, 4294901760
        %v894 = vsub.f32 %v580, %v893
        %v895 = vand.u32 %v894, 4294901760
        %896 = vmatpush.msra.mxu0 %v895
        %v897 = vand.u32 %v579, 4294901760
        %v898 = vsub.f32 %v579, %v897
        %v899 = vand.u32 %v898, 4294901760
        %900 = vmatpush.msra.mxu0 %v899
        %v901 = vand.u32 %v590, 4294901760
        %902 = vmatmul.f32.gmra.mxu0 %v901
        %v903 = vpop.f32.mrf.mxu0
        %v904 = vadd.f32 %v835, %v903
        %v905 = vand.u32 %v593, 4294901760
        %906 = vmatmul.f32.gmra.mxu0 %v905
        %v907 = vpop.f32.mrf.mxu0
        %v908 = vadd.f32 %v841, %v907
        %v909 = vand.u32 %v596, 4294901760
        %910 = vmatmul.f32.gmra.mxu0 %v909
        %v911 = vpop.f32.mrf.mxu0
        %v912 = vadd.f32 %v847, %v911
        %v913 = vand.u32 %v599, 4294901760
        %914 = vmatmul.f32.gmra.mxu0 %v913
        %v915 = vpop.f32.mrf.mxu0
        %v916 = vadd.f32 %v853, %v915
        %v917 = vand.u32 %v602, 4294901760
        %918 = vmatmul.f32.gmra.mxu0 %v917
        %v919 = vpop.f32.mrf.mxu0
        %v920 = vadd.f32 %v859, %v919
        %v921 = vand.u32 %v605, 4294901760
        %922 = vmatmul.f32.gmra.mxu0 %v921
        %v923 = vpop.f32.mrf.mxu0
        %v924 = vadd.f32 %v865, %v923
        %925 = vdwg.mxu0
        %926 = vmatpush.msra.mxu0 0.0
        %927 = vmatpush.msra.mxu0 0.0
        %928 = vmatpush.msra.mxu0 0.0
        %929 = vmatpush.msra.mxu0 0.0
        %930 = vmatpush.msra.mxu0 0.0
        %931 = vmatpush.msra.mxu0 0.0
        %932 = vmatpush.msra.mxu0 0.0
        %933 = vmatpush.msra.mxu0 0.0
        %934 = vmatpush.msra.mxu0 0.0
        %935 = vmatpush.msra.mxu0 0.0
        %v936 = vand.u32 %v584, 4294901760
        %937 = vmatpush.msra.mxu0 %v936
        %v938 = vand.u32 %v583, 4294901760
        %939 = vmatpush.msra.mxu0 %v938
        %v940 = vand.u32 %v582, 4294901760
        %941 = vmatpush.msra.mxu0 %v940
        %v942 = vand.u32 %v581, 4294901760
        %943 = vmatpush.msra.mxu0 %v942
        %v944 = vand.u32 %v580, 4294901760
        %945 = vmatpush.msra.mxu0 %v944
        %v946 = vand.u32 %v579, 4294901760
        %947 = vmatpush.msra.mxu0 %v946
        %v948 = vand.u32 %v590, 4294901760
        %949 = vmatmul.f32.gmra.mxu0 %v948
        %v950 = vpop.f32.mrf.mxu0
        %v951 = vadd.f32 %v904, %v950
        %v952 = vand.u32 %v593, 4294901760
        %953 = vmatmul.f32.gmra.mxu0 %v952
        %v954 = vpop.f32.mrf.mxu0
        %v955 = vadd.f32 %v908, %v954
        %v956 = vand.u32 %v596, 4294901760
        %957 = vmatmul.f32.gmra.mxu0 %v956
        %v958 = vpop.f32.mrf.mxu0
        %v959 = vadd.f32 %v912, %v958
        %v960 = vand.u32 %v599, 4294901760
        %961 = vmatmul.f32.gmra.mxu0 %v960
        %v962 = vpop.f32.mrf.mxu0
        %v963 = vadd.f32 %v916, %v962
        %v964 = vand.u32 %v602, 4294901760
        %965 = vmatmul.f32.gmra.mxu0 %v964
        %v966 = vpop.f32.mrf.mxu0
        %v967 = vadd.f32 %v920, %v966
        %v968 = vand.u32 %v605, 4294901760
        %969 = vmatmul.f32.gmra.mxu0 %v968
        %v970 = vpop.f32.mrf.mxu0
        %v971 = vadd.f32 %v924, %v970
        %972 = vdwg.mxu0
        %973 = vst.msk [vmem:[%s190] sm:$0xff] %vm565, %v951
        %974 = vst.msk [vmem:[%s190 + $0x8] sm:$0xff] %vm565, %v955
        %975 = vst.msk [vmem:[%s190 + $0x10] sm:$0xff] %vm565, %v959
        %976 = vst.msk [vmem:[%s190 + $0x18] sm:$0xff] %vm565, %v963
        %977 = vst.msk [vmem:[%s190 + $0x20] sm:$0xff] %vm565, %v967
        %978 = vst.msk [vmem:[%s190 + $0x28] sm:$0xff] %vm565, %v971
        %s979 = sand.u32 %s115, 1
        %s980 = scalar_lea.sflag [#allocation4], %s979
        %s981 = sand.u32 %s115, 1
        %s982 = smul.addr %s981, 48
        %s983 = scalar_lea.vmem [#allocation3], %s982
        // Predicated region
        $region37: #{tpu_custom_call.1} parent=35 // pred_check
          %p984 = pneg %p125
        $region38: #{tpu_custom_call.1} parent=35 // pred_check_branch
          %986 = sbr.rel (%p984) target = $region40
        $region39: #{tpu_custom_call.1} parent=35 // pred_region
          %988 = vsyncadd %s980, 0
          %s989 = smul.addr %s18, 6
          %s990 = smul.addr %s989, 8
          %s991 = scalar_lea.hbm %s4, %s990
          %s992 = sshll.u32 %s983, 4
          %s993 = int_to_ptr.vmem [resolvable:$true] %s992
          %s994 = sshll.u32 %s991, 4
          %s995 = int_to_ptr.hbm [resolvable:$true] %s994
          %1000 = dma.vmem_to_hbm [thread:$0]  %s993, 768, %s995, %s980, 128, 128, 8
        $region40: #{tpu_custom_call.1} parent=35 // pred_fallthru
          _
      $region36: #{tpu_custom_call.1} parent=5 // pred_fallthru
        _
      %p1001 = scmp.le.s32.totalorder 2, %s13
      // Predicated region
      $region41: #{tpu_custom_call.1} parent=5 // pred_check
        %p1002 = pneg %p1001
      $region42: #{tpu_custom_call.1} parent=5 // pred_check_branch
        %1004 = sbr.rel (%p1002) target = $region44
      $region43: #{tpu_custom_call.1} parent=5 // pred_region
        %s1005 = ssub.s32 %s13, 2
        // Predicated region
        $region45: #{tpu_custom_call.1} parent=43 // pred_check
          %p1006 = pneg %p131
        $region46: #{tpu_custom_call.1} parent=43 // pred_check_branch
          %1008 = sbr.rel (%p1006) target = $region48
        $region47: #{tpu_custom_call.1} parent=43 // pred_region
          %s1009 = sand.u32 %s116, 1
          %s1010 = scalar_lea.sflag [#allocation4], %s1009
          %s1011 = sand.u32 %s116, 1
          %s1012 = smul.addr %s1011, 48
          %s1013 = scalar_lea.vmem [#allocation3], %s1012
          %1015 = dma.done %s1010, 768
        $region48: #{tpu_custom_call.1} parent=43 // pred_fallthru
          _
      $region44: #{tpu_custom_call.1} parent=5 // pred_fallthru
        _
    $region6: #{tpu_custom_call.1} parent=1 // loop_footer
      %s17 = sadd.s32 1, %s13
    $region7: #{tpu_custom_call.1} parent=1 // loop_footer_branch
      %12 = sbr.rel target = $region3
    $region8: #{tpu_custom_call.1} parent=1 // loop_exit
      _
    %1016 = vsyncpa [#allocation4], 1
    %s1017 = scalar_lea.sflag [#allocation4], 1
    %1018 = vsyncpa %s1017, 1

</llo_original>
